<compile_context>
chip_gen: v7x
topology: tpu7x:2x2x1
jax: 0.10.0
libtpu: 0.0.40
codegen_flags: <defaults>
</compile_context>

<pallas_src>
import functools

import jax
import jax.numpy as jnp
from jax.experimental import pallas as pl
from jax.experimental.pallas import tpu as pltpu


def _vmem_capacity_bytes(default=64 * 1024 * 1024):
    """Physical VMEM of the current TPU generation (conservative fallback)."""
    try:
        info = pltpu.get_tpu_info()
        cap = getattr(info, "vmem_capacity_bytes", None)
        if cap:
            return int(cap)
    except Exception:
        pass
    return default


def _my_loss_kernel(t_ref, x_ref, yt_ref, o_ref, acc_ref=None, *,
                    inv_n, n_rows, tn, ragged):
    # grid = (d_tiles [parallel], n_tiles [arbitrary / reduction])
    n_step = pl.program_id(1)

    # f32 outputs accumulate straight into the resident output block;
    # otherwise use the f32 VMEM scratch.
    acc = o_ref if acc_ref is None else acc_ref

    @pl.when(n_step == 0)
    def _():
        acc[...] = jnp.zeros_like(acc)

    x = x_ref[...].astype(jnp.float32)         # (tn, td)
    y_test = yt_ref[...].astype(jnp.float32)   # (tn, 1)
    t_row = t_ref[...].astype(jnp.float32)     # (1, tn)

    diff = x - y_test                          # broadcast (tn,1) over (tn,td)
    sq = diff * diff

    if ragged:
        # x is not padded in HBM: rows >= N of the last tile hold undefined
        # VMEM data.  Mask them explicitly (t==0 alone is not enough, since
        # 0 * NaN = NaN).
        row = jax.lax.broadcasted_iota(jnp.int32, sq.shape, 0)
        valid = (n_step * tn + row) < n_rows
        sq = jnp.where(valid, sq, 0.0)

    # (1, tn) @ (tn, td) -> (1, td) on the MXU; HIGHEST precision so the f32
    # weighted sum matches the f32 reference (MXU cost is hidden by DMA).
    acc[...] += jnp.dot(t_row, sq,
                        preferred_element_type=jnp.float32,
                        precision=jax.lax.Precision.HIGHEST)

    @pl.when(n_step == pl.num_programs(1) - 1)
    def _():
        if acc_ref is None:
            o_ref[...] = o_ref[...] * inv_n
        else:
            o_ref[...] = (acc_ref[...] * inv_n).astype(o_ref.dtype)


def my_loss(x, y, *, max_rows_per_tile=None, max_cols_per_tile=2048,
            target_x_tile_bytes=8 * 1024 * 1024):
    """out[1, D] = (y[:,0]^T @ (x - y[:,1:2])**2) / N  (matches torch module)."""
    N, D = x.shape
    assert y.shape == (N, 2), y.shape
    out_dtype = jnp.result_type(x.dtype, y.dtype)

    # Lane-dense weight row + target column (wrapper-side layout plumbing).
    t_row = y[:, 0].reshape(1, N)
    y_test = y[:, 1].reshape(N, 1)

    # ---- generation-aware VMEM budget --------------------------------------
    phys_vmem = _vmem_capacity_bytes()
    vmem_limit = int(min((phys_vmem * 3) // 4, 96 * 1024 * 1024))

    # ---- column (D) tile: full D if small, else lane-aligned cap -----------
    isz = jnp.dtype(x.dtype).itemsize
    ysz = jnp.dtype(y.dtype).itemsize
    max_cols = max(128, (max_cols_per_tile // 128) * 128)
    td = D if D <= max_cols else max_cols
    grid_d = pl.cdiv(D, td)

    # ---- row (N) tile: byte-budget based ------------------------------------
    # Double-buffered per-row VMEM cost: x row (td*isz) + lane-padded y_test
    # column (128*ysz) + t row element (sublane-padded, ~8*ysz).
    per_row = td * isz + 128 * ysz + 8 * ysz
    tn = min(target_x_tile_bytes // max(td * isz, 1),
             (vmem_limit * 2 // 3) // (2 * per_row))
    tn = max(128, (int(tn) // 128) * 128)
    if max_rows_per_tile is not None:
        tn = min(tn, max(128, (int(max_rows_per_tile) // 128) * 128))
    if N <= tn:
        tn = N                      # single full-extent row tile (always legal)
    grid_n = pl.cdiv(N, tn)
    ragged = (N % tn) != 0

    # Pad ONLY the O(N)-byte vectors so their blocks never read garbage;
    # x itself is never padded (no extra HBM round trip).
    n_pad = grid_n * tn
    if n_pad != N:
        pad = n_pad - N
        t_row = jnp.pad(t_row, ((0, 0), (0, pad)))
        y_test = jnp.pad(y_test, ((0, pad), (0, 0)))

    use_scratch = jnp.dtype(out_dtype) != jnp.dtype(jnp.float32)
    scratch_shapes = [pltpu.VMEM((1, td), jnp.float32)] if use_scratch else []

    kernel = functools.partial(_my_loss_kernel, inv_n=1.0 / N, n_rows=N,
                               tn=tn, ragged=ragged)

    return pl.pallas_call(
        kernel,
        out_shape=jax.ShapeDtypeStruct((1, D), out_dtype),
        grid_spec=pltpu.PrefetchScalarGridSpec(
            num_scalar_prefetch=0,
            grid=(grid_d, grid_n),
            in_specs=[
                pl.BlockSpec((1, tn), lambda d, n: (0, n)),   # t (weights) row
                pl.BlockSpec((tn, td), lambda d, n: (n, d)),  # x tile (streamed)
                pl.BlockSpec((tn, 1), lambda d, n: (n, 0)),   # y_test column
            ],
            out_specs=pl.BlockSpec((1, td), lambda d, n: (0, d)),
            scratch_shapes=scratch_shapes,
        ),
        compiler_params=pltpu.CompilerParams(
            # D tiles are independent ("parallel" -> v7x megacore sharding);
            # N is the reduction axis and stays trailing / "arbitrary".
            dimension_semantics=("parallel", "arbitrary"),
            vmem_limit_bytes=vmem_limit,
        ),
    )(t_row, x, y_test)


def _reference(x, y):
    # Pure-VPU f32 reference (no MXU default-precision ambiguity).
    n = x.shape[0]
    t = y[:, 0][:, None]
    y_test = y[:, 1][:, None]
    return jnp.sum(t * jnp.square(x - y_test), axis=0, keepdims=True) / n


if __name__ == "__main__":
    key = jax.random.PRNGKey(0)
    k1, k2, k3, k4, k5, k6 = jax.random.split(key, 6)

    # 1) Tiny shape: single full-extent row tile (tn = N) path.
    N, D = 8, 32
    x = jax.random.normal(k1, (N, D), dtype=jnp.float32)
    y = jax.random.normal(k2, (N, 2), dtype=jnp.float32)
    out = jax.block_until_ready(my_loss(x, y))
    ref = _reference(x, y)
    assert out.shape == (1, D)
    assert jnp.allclose(out, ref, atol=1e-5, rtol=1e-5)

    # 2) Ragged N: multi-step reduction + in-kernel row masking, x not padded.
    N2, D2 = 300, 128
    x2 = jax.random.normal(k3, (N2, D2), dtype=jnp.float32)
    y2 = jax.random.normal(k4, (N2, 2), dtype=jnp.float32)
    out2 = jax.block_until_ready(my_loss(x2, y2, max_rows_per_tile=128))
    ref2 = _reference(x2, y2)
    assert out2.shape == (1, D2)
    assert jnp.allclose(out2, ref2, atol=1e-4, rtol=1e-4)

    # 3) Tiled D axis (parallel grid dim) combined with ragged N.
    N3, D3 = 160, 256
    x3 = jax.random.normal(k5, (N3, D3), dtype=jnp.float32)
    y3 = jax.random.normal(k6, (N3, 2), dtype=jnp.float32)
    out3 = jax.block_until_ready(
        my_loss(x3, y3, max_rows_per_tile=128, max_cols_per_tile=128))
    ref3 = _reference(x3, y3)
    assert out3.shape == (1, D3)
    assert jnp.allclose(out3, ref3, atol=1e-4, rtol=1e-4)

    print("KERNEL_OK")
</pallas_src>

<mosaic_0001>
module attributes {stable_mosaic.version = 11 : i64} {
  func.func @_my_loss_kernel(%arg0: i32, %arg1: i32, %arg2: memref<1x8xf32, #tpu.memory_space<vmem>>, %arg3: memref<8x32xf32, #tpu.memory_space<vmem>>, %arg4: memref<8x1xf32, #tpu.memory_space<vmem>>, %arg5: memref<1x32xf32, #tpu.memory_space<vmem>>) attributes {dimension_semantics = [#tpu.dimension_semantics<parallel>, #tpu.dimension_semantics<arbitrary>], iteration_bounds = array<i64: 1, 1>, scalar_prefetch = 0 : i64, scratch_operands = 0 : i64, tpu.core_type = #tpu.core_type<tc>, window_params = [{transform_indices = @transform_0, window_bounds = array<i64: 1, 8>}, {transform_indices = @transform_1, window_bounds = array<i64: 8, 32>}, {transform_indices = @transform_2, window_bounds = array<i64: 8, 1>}, {transform_indices = @transform_3, window_bounds = array<i64: 1, 32>}]} {
    %c0_i32 = arith.constant 0 : i32
    %0 = arith.cmpi eq, %arg1, %c0_i32 : i32
    %1 = arith.extui %0 : i1 to i32
    %c0_i32_0 = arith.constant 0 : i32
    %2 = arith.cmpi ne, %1, %c0_i32_0 : i32
    scf.if %2 {
      %cst_12 = arith.constant 0.000000e+00 : f32
      %16 = vector.broadcast %cst_12 : f32 to vector<1x32xf32>
      %c0_13 = arith.constant 0 : index
      %c0_14 = arith.constant 0 : index
      %17 = vector.load %arg5[%c0_13, %c0_14] : memref<1x32xf32, #tpu.memory_space<vmem>>, vector<1x32xf32>
      tpu.vector_store %arg5[%c0_13, %c0_14], %16 {strides = array<i32>} : memref<1x32xf32, #tpu.memory_space<vmem>>, vector<1x32xf32>,
    } else {
    }
    %c0 = arith.constant 0 : index
    %c0_1 = arith.constant 0 : index
    %3 = vector.load %arg3[%c0, %c0_1] : memref<8x32xf32, #tpu.memory_space<vmem>>, vector<8x32xf32>
    %c0_2 = arith.constant 0 : index
    %c0_3 = arith.constant 0 : index
    %4 = vector.load %arg4[%c0_2, %c0_3] : memref<8x1xf32, #tpu.memory_space<vmem>>, vector<8x1xf32>
    %c0_4 = arith.constant 0 : index
    %c0_5 = arith.constant 0 : index
    %5 = vector.load %arg2[%c0_4, %c0_5] : memref<1x8xf32, #tpu.memory_space<vmem>>, vector<1x8xf32>
    %6 = vector.broadcast %4 : vector<8x1xf32> to vector<8x32xf32>
    %7 = arith.subf %3, %6 : vector<8x32xf32>
    %8 = arith.mulf %7, %7 : vector<8x32xf32>
    %c0_6 = arith.constant 0 : index
    %c0_7 = arith.constant 0 : index
    %9 = vector.load %arg5[%c0_6, %c0_7] : memref<1x32xf32, #tpu.memory_space<vmem>>, vector<1x32xf32>
    %cst = arith.constant dense<0.000000e+00> : vector<1x32xf32>
    %10 = tpu.matmul %5, %8, %cst {dimension_numbers = #tpu.dot_dimension_numbers<[1], [0], [0], [1], [0, 0, 1, 1], [], []>, precision = #tpu.contract_precision<fp32>} : vector<1x8xf32>, vector<8x32xf32>, vector<1x32xf32> -> vector<1x32xf32>
    %11 = arith.addf %9, %10 : vector<1x32xf32>
    %c0_8 = arith.constant 0 : index
    %c0_9 = arith.constant 0 : index
    %12 = vector.load %arg5[%c0_8, %c0_9] : memref<1x32xf32, #tpu.memory_space<vmem>>, vector<1x32xf32>
    tpu.vector_store %arg5[%c0_8, %c0_9], %11 {strides = array<i32>} : memref<1x32xf32, #tpu.memory_space<vmem>>, vector<1x32xf32>,
    %c0_i32_10 = arith.constant 0 : i32
    %13 = arith.cmpi eq, %arg1, %c0_i32_10 : i32
    %14 = arith.extui %13 : i1 to i32
    %c0_i32_11 = arith.constant 0 : i32
    %15 = arith.cmpi ne, %14, %c0_i32_11 : i32
    scf.if %15 {
      %c0_12 = arith.constant 0 : index
      %c0_13 = arith.constant 0 : index
      %16 = vector.load %arg5[%c0_12, %c0_13] : memref<1x32xf32, #tpu.memory_space<vmem>>, vector<1x32xf32>
      %cst_14 = arith.constant 1.250000e-01 : f32
      %17 = vector.broadcast %cst_14 : f32 to vector<1x32xf32>
      %18 = arith.mulf %16, %17 : vector<1x32xf32>
      %c0_15 = arith.constant 0 : index
      %c0_16 = arith.constant 0 : index
      %19 = vector.load %arg5[%c0_15, %c0_16] : memref<1x32xf32, #tpu.memory_space<vmem>>, vector<1x32xf32>
      tpu.vector_store %arg5[%c0_15, %c0_16], %18 {strides = array<i32>} : memref<1x32xf32, #tpu.memory_space<vmem>>, vector<1x32xf32>,
    } else {
    }
    return
  }
  func.func @transform_0(%arg0: i32, %arg1: i32) -> (i32, i32) {
    %c0_i32 = arith.constant 0 : i32
    %c0_i32_0 = arith.constant 0 : i32
    return %c0_i32, %arg1 : i32, i32
  }
  func.func @transform_1(%arg0: i32, %arg1: i32) -> (i32, i32) {
    %c0_i32 = arith.constant 0 : i32
    return %arg1, %arg0 : i32, i32
  }
  func.func @transform_2(%arg0: i32, %arg1: i32) -> (i32, i32) {
    %c0_i32 = arith.constant 0 : i32
    %c0_i32_0 = arith.constant 0 : i32
    return %arg1, %c0_i32 : i32, i32
  }
  func.func @transform_3(%arg0: i32, %arg1: i32) -> (i32, i32) {
    %c0_i32 = arith.constant 0 : i32
    %c0_i32_0 = arith.constant 0 : i32
    return %c0_i32, %arg0 : i32, i32
  }
}

</mosaic_0001>

<llo_original>
// kernel: tpu_custom_call.1
$region0: #{tpu_custom_call.1}
  #allocation0 [shape = 'u32[]', space=smem, size = 0x4, offset = 0x4, fixed_abs, tag = 'smem constant byte address 0x4 - core index']
  #allocation1 [shape = 'u32[144,128]{1,0:T(1,128)}', space=vmem, size = 0x12000, scoped, tag = 'internal scratch']
  %s0 = inlined_call_operand.vmem [shape: f32[1,8], index: 0, kind: input, shape index: {}]
  %s1 = inlined_call_operand.vmem [shape: f32[8,32], index: 1, kind: input, shape index: {}]
  %s2 = inlined_call_operand.vmem [shape: f32[8,1], index: 2, kind: input, shape index: {}]
  %s3 = inlined_call_operand.hbm [shape: f32[1,32], index: 3, kind: output, shape index: {}]
  %s4 = sld [smem:[#allocation0]]
  $region30: #{tpu_custom_call.1} parent=0
    _
  %s6 = ssub.s32 1, %s4
  %s7 = scalar_select 0, %s6, %s4
  $region1: #{tpu_custom_call.1} parent=0
    #allocation2 [shape = 'u8[512]{0}', space=vmem, size = 0x400, scoped, tag = 'output window, operand 0, single buffered']
    #allocation3 [shape = 's32[1]{0}', space=sflag, size = 0x4, scoped, tag = 'scoped memory for tpu_custom_call.1']
    %8 = vsyncpa [#allocation3], 0
    // Predicated region
    $region2: #{tpu_custom_call.1} parent=1 // pred_check
      _
    $region3: #{tpu_custom_call.1} parent=1 // pred_check_branch
      %10 = sbr.rel (0) target = $region5
    $region4: #{tpu_custom_call.1} parent=1 // pred_region
      _
    $region5: #{tpu_custom_call.1} parent=1 // pred_fallthru
      _
    // Predicated region
    $region6: #{tpu_custom_call.1} parent=1 // pred_check
      _
    $region7: #{tpu_custom_call.1} parent=1 // pred_check_branch
      %12 = sbr.rel (0) target = $region9
    $region8: #{tpu_custom_call.1} parent=1 // pred_region
      _
    $region9: #{tpu_custom_call.1} parent=1 // pred_fallthru
      _
    // Predicated region
    $region10: #{tpu_custom_call.1} parent=1 // pred_check
      _
    $region11: #{tpu_custom_call.1} parent=1 // pred_check_branch
      %14 = sbr.rel (0) target = $region13
    $region12: #{tpu_custom_call.1} parent=1 // pred_region
      _
    $region13: #{tpu_custom_call.1} parent=1 // pred_fallthru
      _
    %p15 = scmp.eq.s32.totalorder 0, 0
    // Predicated region
    $region14: #{tpu_custom_call.1} parent=1 // pred_check
      %p16 = pneg %p15
    $region15: #{tpu_custom_call.1} parent=1 // pred_check_branch
      %18 = sbr.rel (%p16) target = $region17
    $region16: #{tpu_custom_call.1} parent=1 // pred_region
      %vm19 = vcmask 253952
      %20 = vst.msk [vmem:[#allocation2] sm:$0x1] %vm19, 0.0
    $region17: #{tpu_custom_call.1} parent=1 // pred_fallthru
      _
    %v21 = vld [vmem:[%s1] sm:$0xff]
    %v22 = vld [vmem:[%s2] sm:$0xff]
    %v23 = vld [vmem:[%s0] sm:$0x1]
    %25 = vset.pattern.permute.xlu0 0
    %26 = vperm.xlu0 %25, %v22
    %v27 = vpop.permute.xlu0 %26
    %v29 = vsub.f32 %v21, %v27
    %v30 = vmul.f32 %v29, %v29
    %v31 = vld [vmem:[#allocation2] sm:$0x1]
    %vm32 = vcmask 64512
    %v34 = vsel %vm32, %v23, 0
    %36 = vmatprep.subr.mxu0 0.0
    %v37 = vand.u32 %v30, 4294901760
    %38 = vmatpush1.msra.mxu0 %v37
    %39 = vmatprep.subr.mxu0 0.0
    %40 = vmatpush1.msra.mxu0 0.0
    %41 = vmatprep.subr.mxu0 0.0
    %42 = vmatpush1.msra.mxu0 0.0
    %43 = vmatprep.subr.mxu0 0.0
    %44 = vmatpush1.msra.mxu0 0.0
    %45 = vmatprep.subr.mxu0 0.0
    %46 = vmatpush1.msra.mxu0 0.0
    %47 = vmatprep.subr.mxu0 0.0
    %48 = vmatpush1.msra.mxu0 0.0
    %49 = vmatprep.subr.mxu0 0.0
    %50 = vmatpush1.msra.mxu0 0.0
    %51 = vmatprep.subr.mxu0 0.0
    %52 = vmatpush1.msra.mxu0 0.0
    %53 = vmatprep.subr.mxu0 0.0
    %54 = vmatpush1.msra.mxu0 0.0
    %55 = vmatprep.subr.mxu0 0.0
    %56 = vmatpush1.msra.mxu0 0.0
    %57 = vmatprep.subr.mxu0 0.0
    %58 = vmatpush1.msra.mxu0 0.0
    %59 = vmatprep.subr.mxu0 0.0
    %60 = vmatpush1.msra.mxu0 0.0
    %61 = vmatprep.subr.mxu0 0.0
    %62 = vmatpush1.msra.mxu0 0.0
    %63 = vmatprep.subr.mxu0 0.0
    %64 = vmatpush1.msra.mxu0 0.0
    %65 = vmatprep.subr.mxu0 0.0
    %66 = vmatpush1.msra.mxu0 0.0
    %67 = vmatprep.subr.mxu0 0.0
    %68 = vmatpush1.msra.mxu0 0.0
    %69 = vmatprep.subr.mxu0 0.0
    %70 = vmatpush1.msra.mxu0 0.0
    %71 = vmatprep.subr.mxu0 0.0
    %72 = vmatpush1.msra.mxu0 0.0
    %73 = vmatprep.subr.mxu0 0.0
    %74 = vmatpush1.msra.mxu0 0.0
    %75 = vmatprep.subr.mxu0 0.0
    %76 = vmatpush1.msra.mxu0 0.0
    %77 = vmatprep.subr.mxu0 0.0
    %78 = vmatpush1.msra.mxu0 0.0
    %79 = vmatprep.subr.mxu0 0.0
    %80 = vmatpush1.msra.mxu0 0.0
    %81 = vmatprep.subr.mxu0 0.0
    %82 = vmatpush1.msra.mxu0 0.0
    %83 = vmatprep.subr.mxu0 0.0
    %84 = vmatpush1.msra.mxu0 0.0
    %85 = vmatprep.subr.mxu0 0.0
    %86 = vmatpush1.msra.mxu0 0.0
    %87 = vmatprep.subr.mxu0 0.0
    %88 = vmatpush1.msra.mxu0 0.0
    %89 = vmatprep.subr.mxu0 0.0
    %90 = vmatpush1.msra.mxu0 0.0
    %91 = vmatprep.subr.mxu0 0.0
    %92 = vmatpush1.msra.mxu0 0.0
    %93 = vmatprep.subr.mxu0 0.0
    %94 = vmatpush1.msra.mxu0 0.0
    %95 = vmatprep.subr.mxu0 0.0
    %96 = vmatpush1.msra.mxu0 0.0
    %97 = vmatprep.subr.mxu0 0.0
    %98 = vmatpush1.msra.mxu0 0.0
    %99 = vmatprep.subr.mxu0 0.0
    %100 = vmatpush1.msra.mxu0 0.0
    %101 = vmatprep.mubr.f32.mxu0 0.0
    %v102 = vand.u32 %v34, 4294901760
    %v103 = vsub.f32 %v34, %v102
    %v104 = vand.u32 %v103, 4294901760
    %v105 = vsub.f32 %v103, %v104
    %v106 = vand.u32 %v105, 4294901760
    %107 = vmatmul.mubr.f32.gmra.mrb[0].mxu0 %v106
    %v108 = vpop.f32.mrb[0].mxu0
    %v109 = vadd.f32 0.0, %v108
    %v110 = vpop.f32.mrb[0].mxu0
    %111 = vdwg.mxu0
    %112 = vmatprep.subr.mxu0 0.0
    %v113 = vand.u32 %v30, 4294901760
    %v114 = vsub.f32 %v30, %v113
    %v115 = vand.u32 %v114, 4294901760
    %v116 = vsub.f32 %v114, %v115
    %v117 = vand.u32 %v116, 4294901760
    %118 = vmatpush1.msra.mxu0 %v117
    %119 = vmatprep.subr.mxu0 0.0
    %120 = vmatpush1.msra.mxu0 0.0
    %121 = vmatprep.subr.mxu0 0.0
    %122 = vmatpush1.msra.mxu0 0.0
    %123 = vmatprep.subr.mxu0 0.0
    %124 = vmatpush1.msra.mxu0 0.0
    %125 = vmatprep.subr.mxu0 0.0
    %126 = vmatpush1.msra.mxu0 0.0
    %127 = vmatprep.subr.mxu0 0.0
    %128 = vmatpush1.msra.mxu0 0.0
    %129 = vmatprep.subr.mxu0 0.0
    %130 = vmatpush1.msra.mxu0 0.0
    %131 = vmatprep.subr.mxu0 0.0
    %132 = vmatpush1.msra.mxu0 0.0
    %133 = vmatprep.subr.mxu0 0.0
    %134 = vmatpush1.msra.mxu0 0.0
    %135 = vmatprep.subr.mxu0 0.0
    %136 = vmatpush1.msra.mxu0 0.0
    %137 = vmatprep.subr.mxu0 0.0
    %138 = vmatpush1.msra.mxu0 0.0
    %139 = vmatprep.subr.mxu0 0.0
    %140 = vmatpush1.msra.mxu0 0.0
    %141 = vmatprep.subr.mxu0 0.0
    %142 = vmatpush1.msra.mxu0 0.0
    %143 = vmatprep.subr.mxu0 0.0
    %144 = vmatpush1.msra.mxu0 0.0
    %145 = vmatprep.subr.mxu0 0.0
    %146 = vmatpush1.msra.mxu0 0.0
    %147 = vmatprep.subr.mxu0 0.0
    %148 = vmatpush1.msra.mxu0 0.0
    %149 = vmatprep.subr.mxu0 0.0
    %150 = vmatpush1.msra.mxu0 0.0
    %151 = vmatprep.subr.mxu0 0.0
    %152 = vmatpush1.msra.mxu0 0.0
    %153 = vmatprep.subr.mxu0 0.0
    %154 = vmatpush1.msra.mxu0 0.0
    %155 = vmatprep.subr.mxu0 0.0
    %156 = vmatpush1.msra.mxu0 0.0
    %157 = vmatprep.subr.mxu0 0.0
    %158 = vmatpush1.msra.mxu0 0.0
    %159 = vmatprep.subr.mxu0 0.0
    %160 = vmatpush1.msra.mxu0 0.0
    %161 = vmatprep.subr.mxu0 0.0
    %162 = vmatpush1.msra.mxu0 0.0
    %163 = vmatprep.subr.mxu0 0.0
    %164 = vmatpush1.msra.mxu0 0.0
    %165 = vmatprep.subr.mxu0 0.0
    %166 = vmatpush1.msra.mxu0 0.0
    %167 = vmatprep.subr.mxu0 0.0
    %168 = vmatpush1.msra.mxu0 0.0
    %169 = vmatprep.subr.mxu0 0.0
    %170 = vmatpush1.msra.mxu0 0.0
    %171 = vmatprep.subr.mxu0 0.0
    %172 = vmatpush1.msra.mxu0 0.0
    %173 = vmatprep.subr.mxu0 0.0
    %174 = vmatpush1.msra.mxu0 0.0
    %175 = vmatprep.subr.mxu0 0.0
    %176 = vmatpush1.msra.mxu0 0.0
    %177 = vmatprep.subr.mxu0 0.0
    %178 = vmatpush1.msra.mxu0 0.0
    %179 = vmatprep.subr.mxu0 0.0
    %180 = vmatpush1.msra.mxu0 0.0
    %181 = vmatprep.mubr.f32.mxu0 0.0
    %v182 = vand.u32 %v34, 4294901760
    %183 = vmatmul.mubr.f32.gmra.mrb[0].mxu0 %v182
    %v184 = vpop.f32.mrb[0].mxu0
    %v185 = vadd.f32 %v109, %v184
    %v186 = vpop.f32.mrb[0].mxu0
    %187 = vdwg.mxu0
    %188 = vmatprep.subr.mxu0 0.0
    %v189 = vand.u32 %v30, 4294901760
    %v190 = vsub.f32 %v30, %v189
    %191 = vmatpush1.msra.mxu0 %v190
    %192 = vmatprep.subr.mxu0 0.0
    %193 = vmatpush1.msra.mxu0 0.0
    %194 = vmatprep.subr.mxu0 0.0
    %195 = vmatpush1.msra.mxu0 0.0
    %196 = vmatprep.subr.mxu0 0.0
    %197 = vmatpush1.msra.mxu0 0.0
    %198 = vmatprep.subr.mxu0 0.0
    %199 = vmatpush1.msra.mxu0 0.0
    %200 = vmatprep.subr.mxu0 0.0
    %201 = vmatpush1.msra.mxu0 0.0
    %202 = vmatprep.subr.mxu0 0.0
    %203 = vmatpush1.msra.mxu0 0.0
    %204 = vmatprep.subr.mxu0 0.0
    %205 = vmatpush1.msra.mxu0 0.0
    %206 = vmatprep.subr.mxu0 0.0
    %207 = vmatpush1.msra.mxu0 0.0
    %208 = vmatprep.subr.mxu0 0.0
    %209 = vmatpush1.msra.mxu0 0.0
    %210 = vmatprep.subr.mxu0 0.0
    %211 = vmatpush1.msra.mxu0 0.0
    %212 = vmatprep.subr.mxu0 0.0
    %213 = vmatpush1.msra.mxu0 0.0
    %214 = vmatprep.subr.mxu0 0.0
    %215 = vmatpush1.msra.mxu0 0.0
    %216 = vmatprep.subr.mxu0 0.0
    %217 = vmatpush1.msra.mxu0 0.0
    %218 = vmatprep.subr.mxu0 0.0
    %219 = vmatpush1.msra.mxu0 0.0
    %220 = vmatprep.subr.mxu0 0.0
    %221 = vmatpush1.msra.mxu0 0.0
    %222 = vmatprep.subr.mxu0 0.0
    %223 = vmatpush1.msra.mxu0 0.0
    %224 = vmatprep.subr.mxu0 0.0
    %225 = vmatpush1.msra.mxu0 0.0
    %226 = vmatprep.subr.mxu0 0.0
    %227 = vmatpush1.msra.mxu0 0.0
    %228 = vmatprep.subr.mxu0 0.0
    %229 = vmatpush1.msra.mxu0 0.0
    %230 = vmatprep.subr.mxu0 0.0
    %231 = vmatpush1.msra.mxu0 0.0
    %232 = vmatprep.subr.mxu0 0.0
    %233 = vmatpush1.msra.mxu0 0.0
    %234 = vmatprep.subr.mxu0 0.0
    %235 = vmatpush1.msra.mxu0 0.0
    %236 = vmatprep.subr.mxu0 0.0
    %237 = vmatpush1.msra.mxu0 0.0
    %238 = vmatprep.subr.mxu0 0.0
    %239 = vmatpush1.msra.mxu0 0.0
    %240 = vmatprep.subr.mxu0 0.0
    %241 = vmatpush1.msra.mxu0 0.0
    %242 = vmatprep.subr.mxu0 0.0
    %243 = vmatpush1.msra.mxu0 0.0
    %244 = vmatprep.subr.mxu0 0.0
    %245 = vmatpush1.msra.mxu0 0.0
    %246 = vmatprep.subr.mxu0 0.0
    %247 = vmatpush1.msra.mxu0 0.0
    %248 = vmatprep.subr.mxu0 0.0
    %249 = vmatpush1.msra.mxu0 0.0
    %250 = vmatprep.subr.mxu0 0.0
    %251 = vmatpush1.msra.mxu0 0.0
    %252 = vmatprep.subr.mxu0 0.0
    %253 = vmatpush1.msra.mxu0 0.0
    %254 = vmatprep.mubr.f32.mxu0 0.0
    %v255 = vand.u32 %v34, 4294901760
    %v256 = vsub.f32 %v34, %v255
    %257 = vmatmul.mubr.f32.gmra.mrb[0].mxu0 %v256
    %v258 = vpop.f32.mrb[0].mxu0
    %v259 = vadd.f32 %v185, %v258
    %v260 = vpop.f32.mrb[0].mxu0
    %261 = vdwg.mxu0
    %262 = vmatprep.subr.mxu0 0.0
    %v263 = vand.u32 %v30, 4294901760
    %264 = vmatpush1.msra.mxu0 %v263
    %265 = vmatprep.subr.mxu0 0.0
    %266 = vmatpush1.msra.mxu0 0.0
    %267 = vmatprep.subr.mxu0 0.0
    %268 = vmatpush1.msra.mxu0 0.0
    %269 = vmatprep.subr.mxu0 0.0
    %270 = vmatpush1.msra.mxu0 0.0
    %271 = vmatprep.subr.mxu0 0.0
    %272 = vmatpush1.msra.mxu0 0.0
    %273 = vmatprep.subr.mxu0 0.0
    %274 = vmatpush1.msra.mxu0 0.0
    %275 = vmatprep.subr.mxu0 0.0
    %276 = vmatpush1.msra.mxu0 0.0
    %277 = vmatprep.subr.mxu0 0.0
    %278 = vmatpush1.msra.mxu0 0.0
    %279 = vmatprep.subr.mxu0 0.0
    %280 = vmatpush1.msra.mxu0 0.0
    %281 = vmatprep.subr.mxu0 0.0
    %282 = vmatpush1.msra.mxu0 0.0
    %283 = vmatprep.subr.mxu0 0.0
    %284 = vmatpush1.msra.mxu0 0.0
    %285 = vmatprep.subr.mxu0 0.0
    %286 = vmatpush1.msra.mxu0 0.0
    %287 = vmatprep.subr.mxu0 0.0
    %288 = vmatpush1.msra.mxu0 0.0
    %289 = vmatprep.subr.mxu0 0.0
    %290 = vmatpush1.msra.mxu0 0.0
    %291 = vmatprep.subr.mxu0 0.0
    %292 = vmatpush1.msra.mxu0 0.0
    %293 = vmatprep.subr.mxu0 0.0
    %294 = vmatpush1.msra.mxu0 0.0
    %295 = vmatprep.subr.mxu0 0.0
    %296 = vmatpush1.msra.mxu0 0.0
    %297 = vmatprep.subr.mxu0 0.0
    %298 = vmatpush1.msra.mxu0 0.0
    %299 = vmatprep.subr.mxu0 0.0
    %300 = vmatpush1.msra.mxu0 0.0
    %301 = vmatprep.subr.mxu0 0.0
    %302 = vmatpush1.msra.mxu0 0.0
    %303 = vmatprep.subr.mxu0 0.0
    %304 = vmatpush1.msra.mxu0 0.0
    %305 = vmatprep.subr.mxu0 0.0
    %306 = vmatpush1.msra.mxu0 0.0
    %307 = vmatprep.subr.mxu0 0.0
    %308 = vmatpush1.msra.mxu0 0.0
    %309 = vmatprep.subr.mxu0 0.0
    %310 = vmatpush1.msra.mxu0 0.0
    %311 = vmatprep.subr.mxu0 0.0
    %312 = vmatpush1.msra.mxu0 0.0
    %313 = vmatprep.subr.mxu0 0.0
    %314 = vmatpush1.msra.mxu0 0.0
    %315 = vmatprep.subr.mxu0 0.0
    %316 = vmatpush1.msra.mxu0 0.0
    %317 = vmatprep.subr.mxu0 0.0
    %318 = vmatpush1.msra.mxu0 0.0
    %319 = vmatprep.subr.mxu0 0.0
    %320 = vmatpush1.msra.mxu0 0.0
    %321 = vmatprep.subr.mxu0 0.0
    %322 = vmatpush1.msra.mxu0 0.0
    %323 = vmatprep.subr.mxu0 0.0
    %324 = vmatpush1.msra.mxu0 0.0
    %325 = vmatprep.subr.mxu0 0.0
    %326 = vmatpush1.msra.mxu0 0.0
    %327 = vmatprep.mubr.f32.mxu0 0.0
    %v328 = vand.u32 %v34, 4294901760
    %v329 = vsub.f32 %v34, %v328
    %v330 = vand.u32 %v329, 4294901760
    %331 = vmatmul.mubr.f32.gmra.mrb[0].mxu0 %v330
    %v332 = vpop.f32.mrb[0].mxu0
    %v333 = vadd.f32 %v259, %v332
    %v334 = vpop.f32.mrb[0].mxu0
    %335 = vdwg.mxu0
    %336 = vmatprep.subr.mxu0 0.0
    %v337 = vand.u32 %v30, 4294901760
    %v338 = vsub.f32 %v30, %v337
    %v339 = vand.u32 %v338, 4294901760
    %340 = vmatpush1.msra.mxu0 %v339
    %341 = vmatprep.subr.mxu0 0.0
    %342 = vmatpush1.msra.mxu0 0.0
    %343 = vmatprep.subr.mxu0 0.0
    %344 = vmatpush1.msra.mxu0 0.0
    %345 = vmatprep.subr.mxu0 0.0
    %346 = vmatpush1.msra.mxu0 0.0
    %347 = vmatprep.subr.mxu0 0.0
    %348 = vmatpush1.msra.mxu0 0.0
    %349 = vmatprep.subr.mxu0 0.0
    %350 = vmatpush1.msra.mxu0 0.0
    %351 = vmatprep.subr.mxu0 0.0
    %352 = vmatpush1.msra.mxu0 0.0
    %353 = vmatprep.subr.mxu0 0.0
    %354 = vmatpush1.msra.mxu0 0.0
    %355 = vmatprep.subr.mxu0 0.0
    %356 = vmatpush1.msra.mxu0 0.0
    %357 = vmatprep.subr.mxu0 0.0
    %358 = vmatpush1.msra.mxu0 0.0
    %359 = vmatprep.subr.mxu0 0.0
    %360 = vmatpush1.msra.mxu0 0.0
    %361 = vmatprep.subr.mxu0 0.0
    %362 = vmatpush1.msra.mxu0 0.0
    %363 = vmatprep.subr.mxu0 0.0
    %364 = vmatpush1.msra.mxu0 0.0
    %365 = vmatprep.subr.mxu0 0.0
    %366 = vmatpush1.msra.mxu0 0.0
    %367 = vmatprep.subr.mxu0 0.0
    %368 = vmatpush1.msra.mxu0 0.0
    %369 = vmatprep.subr.mxu0 0.0
    %370 = vmatpush1.msra.mxu0 0.0
    %371 = vmatprep.subr.mxu0 0.0
    %372 = vmatpush1.msra.mxu0 0.0
    %373 = vmatprep.subr.mxu0 0.0
    %374 = vmatpush1.msra.mxu0 0.0
    %375 = vmatprep.subr.mxu0 0.0
    %376 = vmatpush1.msra.mxu0 0.0
    %377 = vmatprep.subr.mxu0 0.0
    %378 = vmatpush1.msra.mxu0 0.0
    %379 = vmatprep.subr.mxu0 0.0
    %380 = vmatpush1.msra.mxu0 0.0
    %381 = vmatprep.subr.mxu0 0.0
    %382 = vmatpush1.msra.mxu0 0.0
    %383 = vmatprep.subr.mxu0 0.0
    %384 = vmatpush1.msra.mxu0 0.0
    %385 = vmatprep.subr.mxu0 0.0
    %386 = vmatpush1.msra.mxu0 0.0
    %387 = vmatprep.subr.mxu0 0.0
    %388 = vmatpush1.msra.mxu0 0.0
    %389 = vmatprep.subr.mxu0 0.0
    %390 = vmatpush1.msra.mxu0 0.0
    %391 = vmatprep.subr.mxu0 0.0
    %392 = vmatpush1.msra.mxu0 0.0
    %393 = vmatprep.subr.mxu0 0.0
    %394 = vmatpush1.msra.mxu0 0.0
    %395 = vmatprep.subr.mxu0 0.0
    %396 = vmatpush1.msra.mxu0 0.0
    %397 = vmatprep.subr.mxu0 0.0
    %398 = vmatpush1.msra.mxu0 0.0
    %399 = vmatprep.subr.mxu0 0.0
    %400 = vmatpush1.msra.mxu0 0.0
    %401 = vmatprep.subr.mxu0 0.0
    %402 = vmatpush1.msra.mxu0 0.0
    %403 = vmatprep.mubr.f32.mxu0 0.0
    %v404 = vand.u32 %v34, 4294901760
    %405 = vmatmul.mubr.f32.gmra.mrb[0].mxu0 %v404
    %v406 = vpop.f32.mrb[0].mxu0
    %v407 = vadd.f32 %v333, %v406
    %v408 = vpop.f32.mrb[0].mxu0
    %409 = vdwg.mxu0
    %410 = vmatprep.subr.mxu0 0.0
    %v411 = vand.u32 %v30, 4294901760
    %412 = vmatpush1.msra.mxu0 %v411
    %413 = vmatprep.subr.mxu0 0.0
    %414 = vmatpush1.msra.mxu0 0.0
    %415 = vmatprep.subr.mxu0 0.0
    %416 = vmatpush1.msra.mxu0 0.0
    %417 = vmatprep.subr.mxu0 0.0
    %418 = vmatpush1.msra.mxu0 0.0
    %419 = vmatprep.subr.mxu0 0.0
    %420 = vmatpush1.msra.mxu0 0.0
    %421 = vmatprep.subr.mxu0 0.0
    %422 = vmatpush1.msra.mxu0 0.0
    %423 = vmatprep.subr.mxu0 0.0
    %424 = vmatpush1.msra.mxu0 0.0
    %425 = vmatprep.subr.mxu0 0.0
    %426 = vmatpush1.msra.mxu0 0.0
    %427 = vmatprep.subr.mxu0 0.0
    %428 = vmatpush1.msra.mxu0 0.0
    %429 = vmatprep.subr.mxu0 0.0
    %430 = vmatpush1.msra.mxu0 0.0
    %431 = vmatprep.subr.mxu0 0.0
    %432 = vmatpush1.msra.mxu0 0.0
    %433 = vmatprep.subr.mxu0 0.0
    %434 = vmatpush1.msra.mxu0 0.0
    %435 = vmatprep.subr.mxu0 0.0
    %436 = vmatpush1.msra.mxu0 0.0
    %437 = vmatprep.subr.mxu0 0.0
    %438 = vmatpush1.msra.mxu0 0.0
    %439 = vmatprep.subr.mxu0 0.0
    %440 = vmatpush1.msra.mxu0 0.0
    %441 = vmatprep.subr.mxu0 0.0
    %442 = vmatpush1.msra.mxu0 0.0
    %443 = vmatprep.subr.mxu0 0.0
    %444 = vmatpush1.msra.mxu0 0.0
    %445 = vmatprep.subr.mxu0 0.0
    %446 = vmatpush1.msra.mxu0 0.0
    %447 = vmatprep.subr.mxu0 0.0
    %448 = vmatpush1.msra.mxu0 0.0
    %449 = vmatprep.subr.mxu0 0.0
    %450 = vmatpush1.msra.mxu0 0.0
    %451 = vmatprep.subr.mxu0 0.0
    %452 = vmatpush1.msra.mxu0 0.0
    %453 = vmatprep.subr.mxu0 0.0
    %454 = vmatpush1.msra.mxu0 0.0
    %455 = vmatprep.subr.mxu0 0.0
    %456 = vmatpush1.msra.mxu0 0.0
    %457 = vmatprep.subr.mxu0 0.0
    %458 = vmatpush1.msra.mxu0 0.0
    %459 = vmatprep.subr.mxu0 0.0
    %460 = vmatpush1.msra.mxu0 0.0
    %461 = vmatprep.subr.mxu0 0.0
    %462 = vmatpush1.msra.mxu0 0.0
    %463 = vmatprep.subr.mxu0 0.0
    %464 = vmatpush1.msra.mxu0 0.0
    %465 = vmatprep.subr.mxu0 0.0
    %466 = vmatpush1.msra.mxu0 0.0
    %467 = vmatprep.subr.mxu0 0.0
    %468 = vmatpush1.msra.mxu0 0.0
    %469 = vmatprep.subr.mxu0 0.0
    %470 = vmatpush1.msra.mxu0 0.0
    %471 = vmatprep.subr.mxu0 0.0
    %472 = vmatpush1.msra.mxu0 0.0
    %473 = vmatprep.subr.mxu0 0.0
    %474 = vmatpush1.msra.mxu0 0.0
    %475 = vmatprep.mubr.f32.mxu0 0.0
    %v476 = vand.u32 %v34, 4294901760
    %477 = vmatmul.mubr.f32.gmra.mrb[0].mxu0 %v476
    %v478 = vpop.f32.mrb[0].mxu0
    %v479 = vadd.f32 %v407, %v478
    %v480 = vpop.f32.mrb[0].mxu0
    %481 = vdwg.mxu0
    %v482 = vadd.f32 %v31, %v479
    %vm483 = vcmask 253952
    %484 = vst.msk [vmem:[#allocation2] sm:$0x1] %vm483, %v482
    // Predicated region
    $region18: #{tpu_custom_call.1} parent=1 // pred_check
      %p485 = pneg %p15
    $region19: #{tpu_custom_call.1} parent=1 // pred_check_branch
      %487 = sbr.rel (%p485) target = $region21
    $region20: #{tpu_custom_call.1} parent=1 // pred_region
      %v488 = vld [vmem:[#allocation2] sm:$0x1]
      %v489 = vmul.f32 %v488, 0.125
      %490 = vst.msk [vmem:[#allocation2] sm:$0x1] %vm483, %v489
    $region21: #{tpu_custom_call.1} parent=1 // pred_fallthru
      _
    // Predicated region
    $region22: #{tpu_custom_call.1} parent=1 // pred_check
      _
    $region23: #{tpu_custom_call.1} parent=1 // pred_check_branch
      %492 = sbr.rel (0) target = $region25
    $region24: #{tpu_custom_call.1} parent=1 // pred_region
      %s494 = ssub.s32 16, 16
      %495 = vsyncadd [#allocation3], %s494
      %s497 = sshll.u32 [#allocation2], 4
      %s498 = int_to_ptr.vmem [resolvable:$true] %s497
      %500 = dma.vmem_to_hbm [thread:$0]  %s498, 16, %s3, [#allocation3]
    $region25: #{tpu_custom_call.1} parent=1 // pred_fallthru
      _
    // Predicated region
    $region26: #{tpu_custom_call.1} parent=1 // pred_check
      _
    $region27: #{tpu_custom_call.1} parent=1 // pred_check_branch
      %502 = sbr.rel (0) target = $region29
    $region28: #{tpu_custom_call.1} parent=1 // pred_region
      %503 = dma.done [#allocation3], 16
    $region29: #{tpu_custom_call.1} parent=1 // pred_fallthru
      _
    %504 = vsyncpa [#allocation3], 1

</llo_original>
